<compile_context>
chip_gen: v7x
topology: tpu7x:2x2x1
jax: 0.10.0
libtpu: 0.0.40
codegen_flags: <defaults>
</compile_context>

<pallas_src>
import functools

import jax
import jax.numpy as jnp
from jax.experimental import pallas as pl
from jax.experimental.pallas import tpu as pltpu


def _contrastive_loss_kernel(o1_ref, o2_ref, t_ref, out_ref, *,
                             margin, eps, tile_b, batch, final_scale):
    pid = pl.program_id(0)

    @pl.when(pid == 0)
    def _init():
        out_ref[...] = jnp.zeros_like(out_ref)

    # Load native-dtype tiles (possibly bf16) and upcast on the VPU.
    o1 = o1_ref[...].astype(jnp.float32)
    o2 = o2_ref[...].astype(jnp.float32)
    diff = o2 - o1
    sq = diff * diff                                        # (TB, D) f32

    # Row-sum over D on the MXU (ones-matmul) -> (TB, 1); keeps the XLU off
    # the critical path.
    ones = jnp.ones((sq.shape[1], 1), jnp.float32)
    d = jnp.dot(sq, ones, preferred_element_type=jnp.float32)

    t = t_ref[...].astype(jnp.float32)                      # (TB, 1)
    hinge = jnp.maximum(margin - (d + eps), 0.0)            # F.relu
    # 0.5 and 1/B are hoisted into final_scale at finalize.
    losses = t * d + (1.0 - t) * hinge                      # (TB, 1)

    # Mask rows past the true batch size (padded / partial last tile).
    row = pid * tile_b + jax.lax.broadcasted_iota(jnp.int32, losses.shape, 0)
    losses = jnp.where(row < batch, losses, 0.0)

    # Resident scalar accumulator (same out block index every grid step).
    out_ref[...] += jnp.sum(losses, keepdims=True)

    @pl.when(pid == pl.num_programs(0) - 1)
    def _finalize():
        out_ref[...] = out_ref[...] * final_scale


def contrastive_loss(output1, output2, target, margin, size_average=True):
    """Pallas implementation of ContrastiveLoss.forward."""
    B, D = output1.shape

    # Matches target.float(); (B, 1) column is tiny, cast in the wrapper.
    t = target.astype(jnp.float32).reshape(B, 1)

    # Batch tile: as big as possible while 2 inputs x 2 pipeline buffers stay
    # inside a conservative VMEM budget that is safe on v5e/v6e/v7x.
    itemsize = jnp.dtype(output1.dtype).itemsize
    bytes_per_row = 2 * D * itemsize                        # both embeddings
    budget = 8 * 1024 * 1024                                # x2 double-buffer
    tb = max(1, min(B, budget // max(bytes_per_row, 1), 1024))
    if tb < B:
        tb = max(8, (tb // 8) * 8)                          # (8, 128) rule
    else:
        tb = B
    num_tiles = pl.cdiv(B, tb)

    final_scale = (0.5 / B) if size_average else 0.5

    kernel = functools.partial(
        _contrastive_loss_kernel,
        margin=float(margin),
        eps=1e-09,
        tile_b=tb,
        batch=B,
        final_scale=float(final_scale),
    )

    out = pl.pallas_call(
        kernel,
        out_shape=jax.ShapeDtypeStruct((1, 1), jnp.float32),
        grid=(num_tiles,),
        in_specs=[
            pl.BlockSpec((tb, D), lambda i: (i, 0)),
            pl.BlockSpec((tb, D), lambda i: (i, 0)),
            pl.BlockSpec((tb, 1), lambda i: (i, 0)),
        ],
        out_specs=pl.BlockSpec((1, 1), lambda i: (0, 0)),
        compiler_params=pltpu.CompilerParams(
            dimension_semantics=("arbitrary",),
            vmem_limit_bytes=48 * 1024 * 1024),
    )(output1, output2, t)

    return out[0, 0]


if __name__ == "__main__":
    # Small, deterministic example inputs consistent with the module.
    B, D = 8, 32
    margin = 1.0

    key = jax.random.PRNGKey(0)
    k1, k2, k3 = jax.random.split(key, 3)
    output1 = jax.random.normal(k1, (B, D), dtype=jnp.float32)
    output2 = jax.random.normal(k2, (B, D), dtype=jnp.float32)
    target = jax.random.bernoulli(k3, 0.5, (B,)).astype(jnp.int32)

    def ref_loss(o1, o2, tgt, size_average=True):
        o1 = o1.astype(jnp.float32)
        o2 = o2.astype(jnp.float32)
        dd = jnp.sum((o2 - o1) ** 2, axis=1)
        tf = tgt.astype(jnp.float32)
        losses = 0.5 * (tf * dd
                        + (1.0 - tf) * jnp.maximum(margin - (dd + 1e-09), 0.0))
        return jnp.mean(losses) if size_average else jnp.sum(losses)

    # f32, mean (size_average=True)
    loss = jax.block_until_ready(
        contrastive_loss(output1, output2, target, margin, size_average=True))
    assert jnp.allclose(loss, ref_loss(output1, output2, target, True),
                        rtol=1e-5, atol=1e-6), loss

    # f32, sum (size_average=False)
    loss_sum = jax.block_until_ready(
        contrastive_loss(output1, output2, target, margin, size_average=False))
    assert jnp.allclose(loss_sum, ref_loss(output1, output2, target, False),
                        rtol=1e-5, atol=1e-6), loss_sum

    # bf16 embeddings travel HBM->VMEM in bf16; kernel upcasts to f32 inside.
    o1_bf = output1.astype(jnp.bfloat16)
    o2_bf = output2.astype(jnp.bfloat16)
    loss_bf = jax.block_until_ready(
        contrastive_loss(o1_bf, o2_bf, target, margin, size_average=True))
    assert jnp.allclose(loss_bf, ref_loss(o1_bf, o2_bf, target, True),
                        rtol=1e-3, atol=1e-4), loss_bf

    print("KERNEL_OK")
</pallas_src>

<mosaic_0001>
module attributes {stable_mosaic.version = 11 : i64} {
  func.func @_contrastive_loss_kernel(%arg0: i32, %arg1: memref<8x32xf32, #tpu.memory_space<vmem>>, %arg2: memref<8x32xf32, #tpu.memory_space<vmem>>, %arg3: memref<8x1xf32, #tpu.memory_space<vmem>>, %arg4: memref<1x1xf32, #tpu.memory_space<vmem>>) attributes {dimension_semantics = [#tpu.dimension_semantics<arbitrary>], iteration_bounds = array<i64: 1>, scalar_prefetch = 0 : i64, scratch_operands = 0 : i64, tpu.core_type = #tpu.core_type<tc>, window_params = [{transform_indices = @transform_0, window_bounds = array<i64: 8, 32>}, {transform_indices = @transform_1, window_bounds = array<i64: 8, 32>}, {transform_indices = @transform_2, window_bounds = array<i64: 8, 1>}, {pipeline_mode = #tpu.pipeline_mode<synchronous>, transform_indices = @transform_3, window_bounds = array<i64: 1, 1>}]} {
    %c0_i32 = arith.constant 0 : i32
    %0 = arith.cmpi eq, %arg0, %c0_i32 : i32
    %1 = arith.extui %0 : i1 to i32
    %c0_i32_0 = arith.constant 0 : i32
    %2 = arith.cmpi ne, %1, %c0_i32_0 : i32
    scf.if %2 {
      %cst_20 = arith.constant 0.000000e+00 : f32
      %40 = vector.broadcast %cst_20 : f32 to vector<1x1xf32>
      %c0_21 = arith.constant 0 : index
      %c0_22 = arith.constant 0 : index
      %41 = vector.load %arg4[%c0_21, %c0_22] : memref<1x1xf32, #tpu.memory_space<vmem>>, vector<1x1xf32>
      tpu.vector_store %arg4[%c0_21, %c0_22], %40 {strides = array<i32>} : memref<1x1xf32, #tpu.memory_space<vmem>>, vector<1x1xf32>,
    } else {
    }
    %c0 = arith.constant 0 : index
    %c0_1 = arith.constant 0 : index
    %3 = vector.load %arg1[%c0, %c0_1] : memref<8x32xf32, #tpu.memory_space<vmem>>, vector<8x32xf32>
    %c0_2 = arith.constant 0 : index
    %c0_3 = arith.constant 0 : index
    %4 = vector.load %arg2[%c0_2, %c0_3] : memref<8x32xf32, #tpu.memory_space<vmem>>, vector<8x32xf32>
    %5 = arith.subf %4, %3 : vector<8x32xf32>
    %6 = arith.mulf %5, %5 : vector<8x32xf32>
    %cst = arith.constant 1.000000e+00 : f32
    %7 = vector.broadcast %cst : f32 to vector<32x1xf32>
    %cst_4 = arith.constant dense<0.000000e+00> : vector<8x1xf32>
    %8 = tpu.matmul %6, %7, %cst_4 {dimension_numbers = #tpu.dot_dimension_numbers<[1], [0], [0], [1], [0, 0, 1, 1], [], []>} : vector<8x32xf32>, vector<32x1xf32>, vector<8x1xf32> -> vector<8x1xf32>
    %c0_5 = arith.constant 0 : index
    %c0_6 = arith.constant 0 : index
    %9 = vector.load %arg3[%c0_5, %c0_6] : memref<8x1xf32, #tpu.memory_space<vmem>>, vector<8x1xf32>
    %cst_7 = arith.constant 9.99999971E-10 : f32
    %10 = vector.broadcast %cst_7 : f32 to vector<8x1xf32>
    %11 = arith.addf %8, %10 : vector<8x1xf32>
    %cst_8 = arith.constant 1.000000e+00 : f32
    %12 = vector.broadcast %cst_8 : f32 to vector<8x1xf32>
    %13 = arith.subf %12, %11 : vector<8x1xf32>
    %cst_9 = arith.constant 0.000000e+00 : f32
    %14 = vector.broadcast %cst_9 : f32 to vector<8x1xf32>
    %15 = arith.maximumf %13, %14 : vector<8x1xf32>
    %16 = arith.mulf %9, %8 : vector<8x1xf32>
    %cst_10 = arith.constant 1.000000e+00 : f32
    %17 = vector.broadcast %cst_10 : f32 to vector<8x1xf32>
    %18 = arith.subf %17, %9 : vector<8x1xf32>
    %19 = arith.mulf %18, %15 : vector<8x1xf32>
    %20 = arith.addf %16, %19 : vector<8x1xf32>
    %c8_i32 = arith.constant 8 : i32
    %21 = arith.muli %arg0, %c8_i32 : i32
    %22 = tpu.iota {dimensions = array<i32: 0>} : vector<8x1xi32>
    %23 = vector.broadcast %21 : i32 to vector<8x1xi32>
    %24 = arith.addi %23, %22 : vector<8x1xi32>
    %c8_i32_11 = arith.constant 8 : i32
    %25 = vector.broadcast %c8_i32_11 : i32 to vector<8x1xi32>
    %26 = arith.cmpi slt, %24, %25 : vector<8x1xi32>
    %cst_12 = arith.constant 0.000000e+00 : f32
    %27 = vector.broadcast %cst_12 : f32 to vector<8x1xf32>
    %28 = arith.select %26, %20, %27 : vector<8x1xi1>, vector<8x1xf32>
    %c0_13 = arith.constant 0 : index
    %c0_14 = arith.constant 0 : index
    %29 = vector.load %arg4[%c0_13, %c0_14] : memref<1x1xf32, #tpu.memory_space<vmem>>, vector<1x1xf32>
    %30 = vector.shape_cast %28 : vector<8x1xf32> to vector<1x8x1xf32>
    %cst_15 = arith.constant dense<0.000000e+00> : vector<1xf32>
    %31 = vector.multi_reduction <add>, %30, %cst_15 [1, 2] : vector<1x8x1xf32> to vector<1xf32>
    %32 = vector.shape_cast %31 : vector<1xf32> to vector<1x1x1xf32>
    %33 = vector.extract %32[0, 0, 0] : f32 from vector<1x1x1xf32>
    %34 = vector.broadcast %33 : f32 to vector<1x1xf32>
    %35 = arith.addf %29, %34 : vector<1x1xf32>
    %c0_16 = arith.constant 0 : index
    %c0_17 = arith.constant 0 : index
    %36 = vector.load %arg4[%c0_16, %c0_17] : memref<1x1xf32, #tpu.memory_space<vmem>>, vector<1x1xf32>
    tpu.vector_store %arg4[%c0_16, %c0_17], %35 {strides = array<i32>} : memref<1x1xf32, #tpu.memory_space<vmem>>, vector<1x1xf32>,
    %c0_i32_18 = arith.constant 0 : i32
    %37 = arith.cmpi eq, %arg0, %c0_i32_18 : i32
    %38 = arith.extui %37 : i1 to i32
    %c0_i32_19 = arith.constant 0 : i32
    %39 = arith.cmpi ne, %38, %c0_i32_19 : i32
    scf.if %39 {
      %c0_20 = arith.constant 0 : index
      %c0_21 = arith.constant 0 : index
      %40 = vector.load %arg4[%c0_20, %c0_21] : memref<1x1xf32, #tpu.memory_space<vmem>>, vector<1x1xf32>
      %cst_22 = arith.constant 6.250000e-02 : f32
      %41 = vector.broadcast %cst_22 : f32 to vector<1x1xf32>
      %42 = arith.mulf %40, %41 : vector<1x1xf32>
      %c0_23 = arith.constant 0 : index
      %c0_24 = arith.constant 0 : index
      %43 = vector.load %arg4[%c0_23, %c0_24] : memref<1x1xf32, #tpu.memory_space<vmem>>, vector<1x1xf32>
      tpu.vector_store %arg4[%c0_23, %c0_24], %42 {strides = array<i32>} : memref<1x1xf32, #tpu.memory_space<vmem>>, vector<1x1xf32>,
    } else {
    }
    return
  }
  func.func @transform_0(%arg0: i32) -> (i32, i32) {
    %c0_i32 = arith.constant 0 : i32
    %c0_i32_0 = arith.constant 0 : i32
    return %arg0, %c0_i32 : i32, i32
  }
  func.func @transform_1(%arg0: i32) -> (i32, i32) {
    %c0_i32 = arith.constant 0 : i32
    %c0_i32_0 = arith.constant 0 : i32
    return %arg0, %c0_i32 : i32, i32
  }
  func.func @transform_2(%arg0: i32) -> (i32, i32) {
    %c0_i32 = arith.constant 0 : i32
    %c0_i32_0 = arith.constant 0 : i32
    return %arg0, %c0_i32 : i32, i32
  }
  func.func @transform_3(%arg0: i32) -> (i32, i32) {
    %c0_i32 = arith.constant 0 : i32
    %c0_i32_0 = arith.constant 0 : i32
    %c0_i32_1 = arith.constant 0 : i32
    return %c0_i32, %c0_i32_0 : i32, i32
  }
}

</mosaic_0001>

<llo_original>
// kernel: tpu_custom_call.1
$region0: #{tpu_custom_call.1}
  #allocation0 [shape = 'u32[]', space=smem, size = 0x4, offset = 0x4, fixed_abs, tag = 'smem constant byte address 0x4 - core index']
  #allocation1 [shape = 'u32[144,128]{1,0:T(1,128)}', space=vmem, size = 0x12000, scoped, tag = 'internal scratch']
  %s0 = inlined_call_operand.vmem [shape: f32[8,32], index: 0, kind: input, shape index: {}]
  %s1 = inlined_call_operand.hbm [shape: f32[8,32], index: 1, kind: input, shape index: {}]
  %s2 = inlined_call_operand.vmem [shape: f32[8,1], index: 2, kind: input, shape index: {}]
  %s3 = inlined_call_operand.hbm [shape: f32[1,1], index: 3, kind: output, shape index: {}]
  %s4 = sld [smem:[#allocation0]]
  $region34: #{tpu_custom_call.1} parent=0
    _
  %s6 = ssub.s32 1, %s4
  %s7 = scalar_select 0, %s6, %s4
  $region1: #{tpu_custom_call.1} parent=0
    #allocation2 [shape = 'u8[4096]{0}', space=vmem, size = 0x1000, scoped, tag = 'input window, operand 1, single buffered']
    #allocation3 [shape = 's32[1]{0}', space=sflag, size = 0x4, scoped, tag = 'scoped memory for tpu_custom_call.1']
    #allocation4 [shape = 's32[1]{0}', space=sflag, size = 0x4, scoped, tag = 'scoped memory for tpu_custom_call.1']
    #allocation5 [shape = 'u8[512]{0}', space=vmem, size = 0x400, scoped, tag = 'output window, operand 0, single buffered']
    %8 = vsyncpa [#allocation3], 0
    %9 = vsyncpa [#allocation4], 0
    // Predicated region
    $region2: #{tpu_custom_call.1} parent=1 // pred_check
      _
    $region3: #{tpu_custom_call.1} parent=1 // pred_check_branch
      %11 = sbr.rel (0) target = $region5
    $region4: #{tpu_custom_call.1} parent=1 // pred_region
      _
    $region5: #{tpu_custom_call.1} parent=1 // pred_fallthru
      _
    // Predicated region
    $region6: #{tpu_custom_call.1} parent=1 // pred_check
      _
    $region7: #{tpu_custom_call.1} parent=1 // pred_check_branch
      %13 = sbr.rel (0) target = $region9
    $region8: #{tpu_custom_call.1} parent=1 // pred_region
      %s15 = ssub.s32 128, 128
      %16 = vsyncadd [#allocation3], %s15
      %s18 = sshll.u32 [#allocation2], 4
      %s19 = int_to_ptr.vmem [resolvable:$true] %s18
      %21 = dma.hbm_to_vmem [thread:$0]  %s1, 128, %s19, [#allocation3]
    $region9: #{tpu_custom_call.1} parent=1 // pred_fallthru
      _
    // Predicated region
    $region10: #{tpu_custom_call.1} parent=1 // pred_check
      _
    $region11: #{tpu_custom_call.1} parent=1 // pred_check_branch
      %23 = sbr.rel (0) target = $region13
    $region12: #{tpu_custom_call.1} parent=1 // pred_region
      _
    $region13: #{tpu_custom_call.1} parent=1 // pred_fallthru
      _
    // Predicated region
    $region14: #{tpu_custom_call.1} parent=1 // pred_check
      _
    $region15: #{tpu_custom_call.1} parent=1 // pred_check_branch
      %25 = sbr.rel (0) target = $region17
    $region16: #{tpu_custom_call.1} parent=1 // pred_region
      %26 = dma.done [#allocation3], 128
    $region17: #{tpu_custom_call.1} parent=1 // pred_fallthru
      _
    %p27 = scmp.eq.s32.totalorder 0, 0
    // Predicated region
    $region18: #{tpu_custom_call.1} parent=1 // pred_check
      %p28 = pneg %p27
    $region19: #{tpu_custom_call.1} parent=1 // pred_check_branch
      %30 = sbr.rel (%p28) target = $region21
    $region20: #{tpu_custom_call.1} parent=1 // pred_region
      %vm31 = vcmask 0
      %32 = vst.msk [vmem:[#allocation5] sm:$0x1] %vm31, 0.0
    $region21: #{tpu_custom_call.1} parent=1 // pred_fallthru
      _
    %v33 = vld [vmem:[%s0] sm:$0xff]
    %v34 = vld [vmem:[#allocation2] sm:$0xff]
    %v35 = vsub.f32 %v34, %v33
    %v36 = vmul.f32 %v35, %v35
    %vm37 = vcmask 261120
    %v39 = vsel %vm37, %v36, 0
    %41 = vmatprep.subr.mxu0 0.0
    %42 = vmatpush1.msra.mxu0 1.0
    %43 = vmatprep.subr.mxu0 0.0
    %44 = vmatpush1.msra.mxu0 1.0
    %45 = vmatprep.subr.mxu0 0.0
    %46 = vmatpush1.msra.mxu0 1.0
    %47 = vmatprep.subr.mxu0 0.0
    %48 = vmatpush1.msra.mxu0 1.0
    %49 = vmatprep.subr.mxu0 0.0
    %50 = vmatpush1.msra.mxu0 0.0
    %51 = vmatprep.subr.mxu0 0.0
    %52 = vmatpush1.msra.mxu0 0.0
    %53 = vmatprep.subr.mxu0 0.0
    %54 = vmatpush1.msra.mxu0 0.0
    %55 = vmatprep.subr.mxu0 0.0
    %56 = vmatpush1.msra.mxu0 0.0
    %57 = vmatprep.subr.mxu0 0.0
    %58 = vmatpush1.msra.mxu0 0.0
    %59 = vmatprep.subr.mxu0 0.0
    %60 = vmatpush1.msra.mxu0 0.0
    %61 = vmatprep.subr.mxu0 0.0
    %62 = vmatpush1.msra.mxu0 0.0
    %63 = vmatprep.subr.mxu0 0.0
    %64 = vmatpush1.msra.mxu0 0.0
    %65 = vmatprep.subr.mxu0 0.0
    %66 = vmatpush1.msra.mxu0 0.0
    %67 = vmatprep.subr.mxu0 0.0
    %68 = vmatpush1.msra.mxu0 0.0
    %69 = vmatprep.subr.mxu0 0.0
    %70 = vmatpush1.msra.mxu0 0.0
    %71 = vmatprep.subr.mxu0 0.0
    %72 = vmatpush1.msra.mxu0 0.0
    %73 = vmatprep.subr.mxu0 0.0
    %74 = vmatpush1.msra.mxu0 0.0
    %75 = vmatprep.subr.mxu0 0.0
    %76 = vmatpush1.msra.mxu0 0.0
    %77 = vmatprep.subr.mxu0 0.0
    %78 = vmatpush1.msra.mxu0 0.0
    %79 = vmatprep.subr.mxu0 0.0
    %80 = vmatpush1.msra.mxu0 0.0
    %81 = vmatprep.subr.mxu0 0.0
    %82 = vmatpush1.msra.mxu0 0.0
    %83 = vmatprep.subr.mxu0 0.0
    %84 = vmatpush1.msra.mxu0 0.0
    %85 = vmatprep.subr.mxu0 0.0
    %86 = vmatpush1.msra.mxu0 0.0
    %87 = vmatprep.subr.mxu0 0.0
    %88 = vmatpush1.msra.mxu0 0.0
    %89 = vmatprep.subr.mxu0 0.0
    %90 = vmatpush1.msra.mxu0 0.0
    %91 = vmatprep.subr.mxu0 0.0
    %92 = vmatpush1.msra.mxu0 0.0
    %93 = vmatprep.subr.mxu0 0.0
    %94 = vmatpush1.msra.mxu0 0.0
    %95 = vmatprep.subr.mxu0 0.0
    %96 = vmatpush1.msra.mxu0 0.0
    %97 = vmatprep.subr.mxu0 0.0
    %98 = vmatpush1.msra.mxu0 0.0
    %99 = vmatprep.subr.mxu0 0.0
    %100 = vmatpush1.msra.mxu0 0.0
    %101 = vmatprep.subr.mxu0 0.0
    %102 = vmatpush1.msra.mxu0 0.0
    %103 = vmatprep.subr.mxu0 0.0
    %104 = vmatpush1.msra.mxu0 0.0
    %105 = vmatprep.mubr.f32.mxu0 0.0
    %106 = vmatmul.mubr.f32.gmra.mrb[0].mxu0 %v39
    %v107 = vpop.f32.mrb[0].mxu0
    %v108 = vadd.f32 0.0, %v107
    %v109 = vpop.f32.mrb[0].mxu0
    %110 = vdwg.mxu0
    %v111 = vld [vmem:[%s2] sm:$0xff]
    %v112 = vadd.f32 %v108, 1e-09
    %v113 = vsub.f32 1.0, %v112
    %v114 = vmax.f32 %v113, 0.0
    %v115 = vmul.f32 %v111, %v108
    %v116 = vsub.f32 1.0, %v111
    %v117 = vmul.f32 %v116, %v114
    %v118 = vadd.f32 %v115, %v117
    %s119 = smul.u32 0, 8
    %v120 = vlaneseq
    %v121 = vshrl.u32 %v120, 7
    %v122 = vstv %s119
    %v123 = vadd.s32 %v122, %v121
    %vm124 = vcmp.lt.s32.totalorder %v123, 8
    %v125 = vsel %vm124, %v118, 0.0
    %v126 = vld [vmem:[#allocation5] sm:$0x1]
    %vm127 = vcmask 7168
    %v128 = vsel %vm127, %v125, 0.0
    %129 = vadd.xlane.f32.xlu0 %v128
    %v130 = vpop.xlane.xlu0 %129
    %v131 = vrot.slane %v130, 4
    %v132 = vadd.f32 %v130, %v131
    %v133 = vrot.slane %v132, 2
    %v134 = vadd.f32 %v132, %v133
    %v135 = vrot.slane %v134, 1
    %v136 = vadd.f32 %v134, %v135
    %s137 = vtos %v136
    %v138 = vstv %s137
    %v139 = vadd.f32 %v126, %v138
    %vm140 = vcmask 0
    %141 = vst.msk [vmem:[#allocation5] sm:$0x1] %vm140, %v139
    // Predicated region
    $region22: #{tpu_custom_call.1} parent=1 // pred_check
      %p142 = pneg %p27
    $region23: #{tpu_custom_call.1} parent=1 // pred_check_branch
      %144 = sbr.rel (%p142) target = $region25
    $region24: #{tpu_custom_call.1} parent=1 // pred_region
      %v145 = vld [vmem:[#allocation5] sm:$0x1]
      %v146 = vmul.f32 %v145, 0.0625
      %147 = vst.msk [vmem:[#allocation5] sm:$0x1] %vm140, %v146
    $region25: #{tpu_custom_call.1} parent=1 // pred_fallthru
      _
    // Predicated region
    $region26: #{tpu_custom_call.1} parent=1 // pred_check
      _
    $region27: #{tpu_custom_call.1} parent=1 // pred_check_branch
      %149 = sbr.rel (0) target = $region29
    $region28: #{tpu_custom_call.1} parent=1 // pred_region
      %s151 = ssub.s32 16, 16
      %152 = vsyncadd [#allocation4], %s151
      %s154 = sshll.u32 [#allocation5], 4
      %s155 = int_to_ptr.vmem [resolvable:$true] %s154
      %157 = dma.vmem_to_hbm [thread:$0]  %s155, 16, %s3, [#allocation4]
    $region29: #{tpu_custom_call.1} parent=1 // pred_fallthru
      _
    // Predicated region
    $region30: #{tpu_custom_call.1} parent=1 // pred_check
      _
    $region31: #{tpu_custom_call.1} parent=1 // pred_check_branch
      %159 = sbr.rel (0) target = $region33
    $region32: #{tpu_custom_call.1} parent=1 // pred_region
      %160 = dma.done [#allocation4], 16
    $region33: #{tpu_custom_call.1} parent=1 // pred_fallthru
      _
    %161 = vsyncpa [#allocation3], 1
    %162 = vsyncpa [#allocation4], 1

</llo_original>
